<compile_context>
chip_gen: v7x
topology: tpu7x:2x2x1
jax: 0.10.0
libtpu: 0.0.40
codegen_flags: <defaults>
</compile_context>

<pallas_src>
import math

import jax
import jax.numpy as jnp
from jax.experimental import pallas as pl
from jax.experimental.pallas import tpu as pltpu


def _copy_kernel(x_ref, o_ref):
    # Identity hot path: load the full VMEM tile and store it back unchanged.
    o_ref[...] = x_ref[...]


def _slab_dims(total, sublane):
    """Pick a lane-dense (M, N) factorization of `total` (total % 128 == 0)."""
    candidates = (8192, 4096, 2048, 1024, 512, 256, 128)
    # Prefer the widest lane dim that also leaves a sublane-aligned row count.
    for cand in candidates:
        if total % cand == 0 and (total // cand) % sublane == 0:
            return total // cand, cand
    for cand in candidates:
        if total % cand == 0:
            return total // cand, cand
    raise ValueError("slab requires total % 128 == 0")


def _pallas_identity_2d(x2d):
    """Copy a 2D array through VMEM with a Pallas kernel (aliased in/out)."""
    M, N = x2d.shape
    itemsize = x2d.dtype.itemsize
    # Dtype-friendly sublane packing: 8 for f32, 16 for bf16, 32 for int8.
    sublane = max(8, 32 // itemsize)

    # Target ~4 MiB per block: big enough to sit near the HBM roofline on
    # v5e/v6e/v7x, small enough that 2 arrays x 2 buffers fits scoped VMEM
    # comfortably even on v7x (64 MiB physical).
    target_block_bytes = 4 * 1024 * 1024
    rows = max(sublane, (target_block_bytes // (N * itemsize)) // sublane * sublane)
    tm = min(rows, M)  # either a multiple of `sublane` or the full extent M

    grid = (pl.cdiv(M, tm),)
    block_bytes = tm * N * itemsize
    # in + out, double-buffered, plus headroom.
    vmem_limit = int(max(16 * 1024 * 1024, 4 * block_bytes + 4 * 1024 * 1024))

    return pl.pallas_call(
        _copy_kernel,
        out_shape=jax.ShapeDtypeStruct((M, N), x2d.dtype),
        grid_spec=pltpu.PrefetchScalarGridSpec(
            num_scalar_prefetch=0,
            grid=grid,
            in_specs=[pl.BlockSpec((tm, N), lambda i: (i, 0))],
            out_specs=pl.BlockSpec((tm, N), lambda i: (i, 0)),
        ),
        compiler_params=pltpu.CompilerParams(
            dimension_semantics=("parallel",),
            vmem_limit_bytes=vmem_limit,
        ),
        # Alias the (sole) input to the (sole) output: no extra HBM buffer.
        input_output_aliases={0: 0},
        cost_estimate=pl.CostEstimate(
            flops=0,
            transcendentals=0,
            bytes_accessed=2 * M * N * itemsize,
        ),
    )(x2d)


def view_forward(x, shape):
    """Equivalent of torch View(*shape): x.view(-1, *shape)."""
    total = x.size
    tail = math.prod(shape) if shape else 1
    assert total % tail == 0, "input numel not divisible by prod(shape)"
    lead = total // tail
    out_shape = (lead,) + tuple(shape)

    itemsize = x.dtype.itemsize
    sublane = max(8, 32 // itemsize)

    flat = x.reshape(total)
    aligned = (total // 128) * 128

    if aligned == 0:
        # Tiny input (< 128 elems): single full-extent block is safe.
        out_flat = _pallas_identity_2d(flat.reshape(1, total)).reshape(total)
        return out_flat.reshape(out_shape)

    M, N = _slab_dims(aligned, sublane)
    out_main = _pallas_identity_2d(flat[:aligned].reshape(M, N)).reshape(aligned)

    if aligned == total:
        out_flat = out_main
    else:
        # Small (< 128 elem) unaligned tail handled in plain JAX; keeps the
        # kernel's blocks lane-dense and avoids masked/partial stores.
        out_flat = jnp.concatenate([out_main, flat[aligned:]])

    return out_flat.reshape(out_shape)


if __name__ == "__main__":
    key = jax.random.PRNGKey(0)

    # Matches torch usage like View(4, 16, 16) applied to an NCHW batch.
    x = jax.random.normal(key, (2, 4, 16, 16), dtype=jnp.float32)
    target_shape = (4, 16, 16)

    out = view_forward(x, target_shape)
    out = jax.block_until_ready(out)

    ref = x.reshape((-1,) + target_shape)
    assert out.shape == (2, 4, 16, 16), out.shape
    assert out.dtype == x.dtype
    assert bool(jnp.all(out == ref))

    # Exercise the non-multiple-of-128 remainder path as well.
    x2 = jax.random.normal(jax.random.PRNGKey(1), (2, 3, 5, 7), dtype=jnp.float32)
    out2 = jax.block_until_ready(view_forward(x2, (3, 5, 7)))
    assert out2.shape == (2, 3, 5, 7)
    assert bool(jnp.all(out2 == x2.reshape((-1, 3, 5, 7))))

    print("KERNEL_OK")
</pallas_src>

<mosaic_0001>
module attributes {stable_mosaic.version = 11 : i64} {
  func.func @_copy_kernel(%arg0: i32, %arg1: memref<8x256xf32, #tpu.memory_space<vmem>>, %arg2: memref<8x256xf32, #tpu.memory_space<vmem>>) attributes {dimension_semantics = [#tpu.dimension_semantics<parallel>], iteration_bounds = array<i64: 1>, scalar_prefetch = 0 : i64, scratch_operands = 0 : i64, tpu.core_type = #tpu.core_type<tc>, window_params = [{transform_indices = @transform_0, window_bounds = array<i64: 8, 256>}, {transform_indices = @transform_1, window_bounds = array<i64: 8, 256>}]} {
    %c0 = arith.constant 0 : index
    %c0_0 = arith.constant 0 : index
    %0 = vector.load %arg1[%c0, %c0_0] : memref<8x256xf32, #tpu.memory_space<vmem>>, vector<8x256xf32>
    %c0_1 = arith.constant 0 : index
    %c0_2 = arith.constant 0 : index
    %1 = vector.load %arg2[%c0_1, %c0_2] : memref<8x256xf32, #tpu.memory_space<vmem>>, vector<8x256xf32>
    tpu.vector_store %arg2[%c0_1, %c0_2], %0 {strides = array<i32>} : memref<8x256xf32, #tpu.memory_space<vmem>>, vector<8x256xf32>,
    return
  }
  func.func @transform_0(%arg0: i32) -> (i32, i32) {
    %c0_i32 = arith.constant 0 : i32
    %c0_i32_0 = arith.constant 0 : i32
    return %arg0, %c0_i32 : i32, i32
  }
  func.func @transform_1(%arg0: i32) -> (i32, i32) {
    %c0_i32 = arith.constant 0 : i32
    %c0_i32_0 = arith.constant 0 : i32
    return %arg0, %c0_i32 : i32, i32
  }
}

</mosaic_0001>

<llo_original>
// kernel: tpu_custom_call.1
$region0: #{tpu_custom_call.1}
  #allocation0 [shape = 'u32[]', space=smem, size = 0x4, offset = 0x4, fixed_abs, tag = 'smem constant byte address 0x4 - core index']
  #allocation1 [shape = 'u32[144,128]{1,0:T(1,128)}', space=vmem, size = 0x12000, scoped, tag = 'internal scratch']
  %s0 = inlined_call_operand.hbm [shape: f32[8,256], index: 0, kind: input, shape index: {}, may-alias: {0,1}]
  %s1 = inlined_call_operand.hbm [shape: f32[8,256], index: 1, kind: output, shape index: {}, may-alias: {0,1}]
  %s2 = sld [smem:[#allocation0]]
  $region18: #{tpu_custom_call.1} parent=0
    _
  %s4 = ssub.s32 1, %s2
  %s5 = scalar_select 0, %s4, %s2
  $region1: #{tpu_custom_call.1} parent=0
    #allocation2 [shape = 'u8[8192]{0}', space=vmem, size = 0x2000, scoped, tag = 'input window, operand 0, single buffered']
    #allocation3 [shape = 's32[1]{0}', space=sflag, size = 0x4, scoped, tag = 'scoped memory for tpu_custom_call.1']
    #allocation4 [shape = 's32[1]{0}', space=sflag, size = 0x4, scoped, tag = 'scoped memory for tpu_custom_call.1']
    #allocation5 [shape = 'u8[8192]{0}', space=vmem, size = 0x2000, scoped, tag = 'output window, operand 0, single buffered']
    %6 = vsyncpa [#allocation3], 0
    %7 = vsyncpa [#allocation4], 0
    // Predicated region
    $region2: #{tpu_custom_call.1} parent=1 // pred_check
      _
    $region3: #{tpu_custom_call.1} parent=1 // pred_check_branch
      %9 = sbr.rel (0) target = $region5
    $region4: #{tpu_custom_call.1} parent=1 // pred_region
      %s11 = ssub.s32 256, 256
      %12 = vsyncadd [#allocation3], %s11
      %s14 = sshll.u32 [#allocation2], 4
      %s15 = int_to_ptr.vmem [resolvable:$true] %s14
      %17 = dma.hbm_to_vmem [thread:$0]  %s0, 256, %s15, [#allocation3]
    $region5: #{tpu_custom_call.1} parent=1 // pred_fallthru
      _
    // Predicated region
    $region6: #{tpu_custom_call.1} parent=1 // pred_check
      _
    $region7: #{tpu_custom_call.1} parent=1 // pred_check_branch
      %19 = sbr.rel (0) target = $region9
    $region8: #{tpu_custom_call.1} parent=1 // pred_region
      %20 = dma.done [#allocation3], 256
    $region9: #{tpu_custom_call.1} parent=1 // pred_fallthru
      _
    %v21 = vld [vmem:[#allocation2] sm:$0xff]
    %v22 = vld [vmem:[#allocation2 + $0x8] sm:$0xff]
    %23 = vst [vmem:[#allocation5] sm:$0xff] %v21
    %24 = vst [vmem:[#allocation5 + $0x8] sm:$0xff] %v22
    // Predicated region
    $region10: #{tpu_custom_call.1} parent=1 // pred_check
      _
    $region11: #{tpu_custom_call.1} parent=1 // pred_check_branch
      %26 = sbr.rel (0) target = $region13
    $region12: #{tpu_custom_call.1} parent=1 // pred_region
      %s28 = ssub.s32 256, 256
      %29 = vsyncadd [#allocation4], %s28
      %s31 = sshll.u32 [#allocation5], 4
      %s32 = int_to_ptr.vmem [resolvable:$true] %s31
      %34 = dma.vmem_to_hbm [thread:$0]  %s32, 256, %s1, [#allocation4]
    $region13: #{tpu_custom_call.1} parent=1 // pred_fallthru
      _
    // Predicated region
    $region14: #{tpu_custom_call.1} parent=1 // pred_check
      _
    $region15: #{tpu_custom_call.1} parent=1 // pred_check_branch
      %36 = sbr.rel (0) target = $region17
    $region16: #{tpu_custom_call.1} parent=1 // pred_region
      %37 = dma.done [#allocation4], 256
    $region17: #{tpu_custom_call.1} parent=1 // pred_fallthru
      _
    %38 = vsyncpa [#allocation3], 1
    %39 = vsyncpa [#allocation4], 1

</llo_original>
